<compile_context>
chip_gen: v7x
topology: tpu7x:2x2x1
jax: 0.10.0
libtpu: 0.0.40
codegen_flags: <defaults>
</compile_context>

<pallas_src>
import jax
import jax.numpy as jnp
from jax import lax
from jax.experimental import pallas as pl
from jax.experimental.pallas import tpu as pltpu

LANES = 128
SUBLANES = 8
_CHUNK_ROWS = 512                       # in-kernel fold granularity (bounds temporaries)
_INPUT_VMEM_BUDGET = 8 * 1024 * 1024    # double-buffered input bytes (v5e-safe)
_MAX_TILE_ROWS = 8192


def _sublane_pack(dtype) -> int:
    """Sublane packing requirement for a streamed dtype: 8 (32b) / 16 (16b) / 32 (8b)."""
    return SUBLANES * max(1, 4 // jnp.dtype(dtype).itemsize)


def _num_tensorcores() -> int:
    """Best-effort TensorCore count; conservatively defaults to 1."""
    try:
        info = pltpu.get_tpu_info()
        for attr in ("num_cores", "core_count", "num_tensorcores", "tensor_core_count"):
            v = getattr(info, attr, None)
            if isinstance(v, int) and v >= 1:
                return v
    except Exception:
        pass
    try:
        if "v7" in jax.devices()[0].device_kind.lower():
            return 2
    except Exception:
        pass
    return 1


def _fast_sigmoid(x):
    # Exact identity, but a single EUP push (tanh) instead of exp + divide.
    return 0.5 * jnp.tanh(0.5 * x) + 0.5


def _fold(x):
    """(rows, 128) f32 -> (8, 128) partial sums; layout-preserving, pure VPU adds."""
    rows = x.shape[0]
    return jnp.sum(x.reshape(rows // SUBLANES, SUBLANES, LANES), axis=0)


def _dice_kernel(yp_ref, yt_ref, inter_ref, den_ref):
    """Accumulate per-split partial sums into resident (1, 8, 128) output blocks."""
    step = pl.program_id(1)  # reduction (row-block) axis

    @pl.when(step == 0)
    def _():
        inter_ref[...] = jnp.zeros_like(inter_ref)
        den_ref[...] = jnp.zeros_like(den_ref)

    tile_rows = yp_ref.shape[0]
    chunk = min(tile_rows, _CHUNK_ROWS)
    n_chunks = tile_rows // chunk  # exact by construction in the wrapper

    def partials(yp, yt):
        p = _fast_sigmoid(yp.astype(jnp.float32))
        t = yt.astype(jnp.float32)
        return _fold(t * p), _fold(t + p)  # fused sum(t) + sum(p)

    if n_chunks == 1:
        inter, den = partials(yp_ref[...], yt_ref[...])
    else:
        # Chunked fold bounds the f32 temporaries to ~chunk*128*4 bytes each.
        def body(c, carry):
            i_acc, d_acc = carry
            r0 = pl.multiple_of(c * chunk, chunk)
            i_c, d_c = partials(yp_ref[pl.ds(r0, chunk), :],
                                yt_ref[pl.ds(r0, chunk), :])
            return i_acc + i_c, d_acc + d_c

        zeros = jnp.zeros((SUBLANES, LANES), jnp.float32)
        inter, den = lax.fori_loop(0, n_chunks, body, (zeros, zeros))

    inter_ref[...] += inter[None]
    den_ref[...] += den[None]


@jax.jit
def dice_loss(y_pred, y_true):
    assert y_pred.shape == y_true.shape
    n = y_pred.size

    it_p = jnp.dtype(y_pred.dtype).itemsize
    it_t = jnp.dtype(y_true.dtype).itemsize
    align = max(_sublane_pack(y_pred.dtype), _sublane_pack(y_true.dtype))

    rows_total = n // LANES

    # Dtype-aware tile sizing: keep double-buffered input blocks ~8 MiB total.
    max_tile_rows = _INPUT_VMEM_BUDGET // (2 * LANES * (it_p + it_t))
    max_tile_rows = max(_CHUNK_ROWS,
                        min(_MAX_TILE_ROWS, (max_tile_rows // _CHUNK_ROWS) * _CHUNK_ROWS))

    if rows_total >= _CHUNK_ROWS:
        tile_rows = min(max_tile_rows, (rows_total // _CHUNK_ROWS) * _CHUNK_ROWS)
    else:
        tile_rows = (rows_total // align) * align  # single small tile

    flat_p = y_pred.reshape(-1)  # bitcast-only for contiguous inputs
    flat_t = y_true.reshape(-1)

    if tile_rows == 0:
        # Input smaller than one aligned tile: pure jnp (kernel has no bulk to run on).
        inter = jnp.float32(0.0)
        den = jnp.float32(0.0)
        bulk_elems = 0
    else:
        steps_total = rows_total // tile_rows
        num_splits = 2 if (_num_tensorcores() >= 2 and steps_total >= 2) else 1
        steps = steps_total // num_splits
        bulk_rows = num_splits * steps * tile_rows
        bulk_elems = bulk_rows * LANES

        # Lane-dense 2-D view; zero-copy whenever n is a multiple of 128 (the
        # common case for (N,C,H,W) segmentation shapes).
        def to_2d(flat):
            if n % LANES == 0:
                return flat.reshape(rows_total, LANES)
            return flat[: rows_total * LANES].reshape(rows_total, LANES)

        yp2d = to_2d(flat_p)
        yt2d = to_2d(flat_t)

        in_spec = pl.BlockSpec((tile_rows, LANES), lambda c, i: (c * steps + i, 0))
        acc_spec = pl.BlockSpec((1, SUBLANES, LANES), lambda c, i: (c, 0, 0))
        acc_shape = jax.ShapeDtypeStruct((num_splits, SUBLANES, LANES), jnp.float32)

        split_sem = (getattr(pltpu, "CORE_PARALLEL", "parallel")
                     if num_splits > 1 else "arbitrary")

        inter_part, den_part = pl.pallas_call(
            _dice_kernel,
            out_shape=(acc_shape, acc_shape),
            grid_spec=pltpu.PrefetchScalarGridSpec(
                num_scalar_prefetch=0,
                grid=(num_splits, steps),
                in_specs=[in_spec, in_spec],
                out_specs=(acc_spec, acc_spec),
            ),
            compiler_params=pltpu.CompilerParams(
                dimension_semantics=(split_sem, "arbitrary"),
            ),
        )(yp2d, yt2d)

        inter = jnp.sum(inter_part)
        den = jnp.sum(den_part)

    # Sub-tile tail: handled with plain jnp (reads only the tail bytes).
    if bulk_elems < n:
        tp = jax.nn.sigmoid(flat_p[bulk_elems:].astype(jnp.float32))
        tt = flat_t[bulk_elems:].astype(jnp.float32)
        inter = inter + jnp.sum(tt * tp)
        den = den + jnp.sum(tt) + jnp.sum(tp)

    return 1.0 - 2.0 * inter / (den + 0.001)


def _dice_loss_ref(y_pred, y_true):
    p = jax.nn.sigmoid(y_pred.astype(jnp.float32))
    t = y_true.astype(jnp.float32)
    inter = jnp.sum(t * p)
    denom = jnp.sum(t) + jnp.sum(p)
    return 1.0 - 2.0 * inter / (denom + 0.001)


if __name__ == "__main__":
    key = jax.random.PRNGKey(0)

    def make_inputs(shape, k):
        k1, k2 = jax.random.split(k)
        yp = jax.random.normal(k1, shape, dtype=jnp.float32)
        yt = (jax.random.uniform(k2, shape) > 0.5).astype(jnp.float32)
        return yp, yt

    # Primary small demo shape: logits + binary mask (N, C, H, W).
    k0, k1, k2 = jax.random.split(key, 3)
    y_pred, y_true = make_inputs((2, 4, 16, 16), k0)
    loss = dice_loss(y_pred, y_true)
    loss = jax.block_until_ready(loss)
    ref = _dice_loss_ref(y_pred, y_true)
    assert jnp.allclose(loss, ref, atol=1e-5, rtol=1e-5), (loss, ref)

    # Ragged shape: exercises the non-128-multiple / jnp-tail path.
    yp_r, yt_r = make_inputs((2, 3, 17, 19), k1)
    loss_r = jax.block_until_ready(dice_loss(yp_r, yt_r))
    ref_r = _dice_loss_ref(yp_r, yt_r)
    assert jnp.allclose(loss_r, ref_r, atol=1e-5, rtol=1e-5), (loss_r, ref_r)

    # Larger shape: exercises multi-step accumulation + chunked in-kernel fold.
    yp_b, yt_b = make_inputs((2, 2, 512, 520), k2)
    loss_b = jax.block_until_ready(dice_loss(yp_b, yt_b))
    ref_b = _dice_loss_ref(yp_b, yt_b)
    assert jnp.allclose(loss_b, ref_b, atol=1e-5, rtol=1e-5), (loss_b, ref_b)

    print("KERNEL_OK")
</pallas_src>

<mosaic_0001>
module attributes {stable_mosaic.version = 11 : i64} {
  func.func @_dice_kernel(%arg0: i32, %arg1: i32, %arg2: memref<16x128xf32, #tpu.memory_space<vmem>>, %arg3: memref<16x128xf32, #tpu.memory_space<vmem>>, %arg4: memref<1x8x128xf32, #tpu.memory_space<vmem>>, %arg5: memref<1x8x128xf32, #tpu.memory_space<vmem>>) attributes {dimension_semantics = [#tpu.dimension_semantics<arbitrary>, #tpu.dimension_semantics<arbitrary>], iteration_bounds = array<i64: 1, 1>, scalar_prefetch = 0 : i64, scratch_operands = 0 : i64, tpu.core_type = #tpu.core_type<tc>, window_params = [{transform_indices = @transform_0, window_bounds = array<i64: 16, 128>}, {transform_indices = @transform_1, window_bounds = array<i64: 16, 128>}, {transform_indices = @transform_2, window_bounds = array<i64: 1, 8, 128>}, {transform_indices = @transform_3, window_bounds = array<i64: 1, 8, 128>}]} {
    %c0_i32 = arith.constant 0 : i32
    %0 = arith.cmpi eq, %arg1, %c0_i32 : i32
    %1 = arith.extui %0 : i1 to i32
    %c0_i32_0 = arith.constant 0 : i32
    %2 = arith.cmpi ne, %1, %c0_i32_0 : i32
    scf.if %2 {
      %cst_20 = arith.constant 0.000000e+00 : f32
      %26 = vector.broadcast %cst_20 : f32 to vector<1x8x128xf32>
      %c0_21 = arith.constant 0 : index
      %c0_22 = arith.constant 0 : index
      %c0_23 = arith.constant 0 : index
      %27 = vector.load %arg4[%c0_21, %c0_22, %c0_23] : memref<1x8x128xf32, #tpu.memory_space<vmem>>, vector<1x8x128xf32>
      tpu.vector_store %arg4[%c0_21, %c0_22, %c0_23], %26 {strides = array<i32>} : memref<1x8x128xf32, #tpu.memory_space<vmem>>, vector<1x8x128xf32>,
      %cst_24 = arith.constant 0.000000e+00 : f32
      %28 = vector.broadcast %cst_24 : f32 to vector<1x8x128xf32>
      %c0_25 = arith.constant 0 : index
      %c0_26 = arith.constant 0 : index
      %c0_27 = arith.constant 0 : index
      %29 = vector.load %arg5[%c0_25, %c0_26, %c0_27] : memref<1x8x128xf32, #tpu.memory_space<vmem>>, vector<1x8x128xf32>
      tpu.vector_store %arg5[%c0_25, %c0_26, %c0_27], %28 {strides = array<i32>} : memref<1x8x128xf32, #tpu.memory_space<vmem>>, vector<1x8x128xf32>,
    } else {
    }
    %c0 = arith.constant 0 : index
    %c0_1 = arith.constant 0 : index
    %3 = vector.load %arg2[%c0, %c0_1] : memref<16x128xf32, #tpu.memory_space<vmem>>, vector<16x128xf32>
    %c0_2 = arith.constant 0 : index
    %c0_3 = arith.constant 0 : index
    %4 = vector.load %arg3[%c0_2, %c0_3] : memref<16x128xf32, #tpu.memory_space<vmem>>, vector<16x128xf32>
    %cst = arith.constant 5.000000e-01 : f32
    %5 = vector.broadcast %cst : f32 to vector<16x128xf32>
    %6 = arith.mulf %5, %3 : vector<16x128xf32>
    %7 = math.tanh %6 : vector<16x128xf32>
    %cst_4 = arith.constant 5.000000e-01 : f32
    %8 = vector.broadcast %cst_4 : f32 to vector<16x128xf32>
    %9 = arith.mulf %8, %7 : vector<16x128xf32>
    %cst_5 = arith.constant 5.000000e-01 : f32
    %10 = vector.broadcast %cst_5 : f32 to vector<16x128xf32>
    %11 = arith.addf %9, %10 : vector<16x128xf32>
    %12 = arith.mulf %4, %11 : vector<16x128xf32>
    %13 = vector.shape_cast %12 : vector<16x128xf32> to vector<2x8x128xf32>
    %cst_6 = arith.constant dense<0.000000e+00> : vector<8x128xf32>
    %14 = vector.multi_reduction <add>, %13, %cst_6 [0] : vector<2x8x128xf32> to vector<8x128xf32>
    %15 = arith.addf %4, %11 : vector<16x128xf32>
    %16 = vector.shape_cast %15 : vector<16x128xf32> to vector<2x8x128xf32>
    %cst_7 = arith.constant dense<0.000000e+00> : vector<8x128xf32>
    %17 = vector.multi_reduction <add>, %16, %cst_7 [0] : vector<2x8x128xf32> to vector<8x128xf32>
    %c0_8 = arith.constant 0 : index
    %c0_9 = arith.constant 0 : index
    %c0_10 = arith.constant 0 : index
    %18 = vector.load %arg4[%c0_8, %c0_9, %c0_10] : memref<1x8x128xf32, #tpu.memory_space<vmem>>, vector<1x8x128xf32>
    %19 = vector.shape_cast %14 : vector<8x128xf32> to vector<1x8x128xf32>
    %20 = arith.addf %18, %19 : vector<1x8x128xf32>
    %c0_11 = arith.constant 0 : index
    %c0_12 = arith.constant 0 : index
    %c0_13 = arith.constant 0 : index
    %21 = vector.load %arg4[%c0_11, %c0_12, %c0_13] : memref<1x8x128xf32, #tpu.memory_space<vmem>>, vector<1x8x128xf32>
    tpu.vector_store %arg4[%c0_11, %c0_12, %c0_13], %20 {strides = array<i32>} : memref<1x8x128xf32, #tpu.memory_space<vmem>>, vector<1x8x128xf32>,
    %c0_14 = arith.constant 0 : index
    %c0_15 = arith.constant 0 : index
    %c0_16 = arith.constant 0 : index
    %22 = vector.load %arg5[%c0_14, %c0_15, %c0_16] : memref<1x8x128xf32, #tpu.memory_space<vmem>>, vector<1x8x128xf32>
    %23 = vector.shape_cast %17 : vector<8x128xf32> to vector<1x8x128xf32>
    %24 = arith.addf %22, %23 : vector<1x8x128xf32>
    %c0_17 = arith.constant 0 : index
    %c0_18 = arith.constant 0 : index
    %c0_19 = arith.constant 0 : index
    %25 = vector.load %arg5[%c0_17, %c0_18, %c0_19] : memref<1x8x128xf32, #tpu.memory_space<vmem>>, vector<1x8x128xf32>
    tpu.vector_store %arg5[%c0_17, %c0_18, %c0_19], %24 {strides = array<i32>} : memref<1x8x128xf32, #tpu.memory_space<vmem>>, vector<1x8x128xf32>,
    return
  }
  func.func @transform_0(%arg0: i32, %arg1: i32) -> (i32, i32) {
    %c1_i32 = arith.constant 1 : i32
    %0 = arith.muli %arg0, %c1_i32 : i32
    %1 = arith.addi %0, %arg1 : i32
    %c0_i32 = arith.constant 0 : i32
    %c0_i32_0 = arith.constant 0 : i32
    return %1, %c0_i32 : i32, i32
  }
  func.func @transform_1(%arg0: i32, %arg1: i32) -> (i32, i32) {
    %c1_i32 = arith.constant 1 : i32
    %0 = arith.muli %arg0, %c1_i32 : i32
    %1 = arith.addi %0, %arg1 : i32
    %c0_i32 = arith.constant 0 : i32
    %c0_i32_0 = arith.constant 0 : i32
    return %1, %c0_i32 : i32, i32
  }
  func.func @transform_2(%arg0: i32, %arg1: i32) -> (i32, i32, i32) {
    %c0_i32 = arith.constant 0 : i32
    %c0_i32_0 = arith.constant 0 : i32
    %c0_i32_1 = arith.constant 0 : i32
    return %arg0, %c0_i32, %c0_i32_0 : i32, i32, i32
  }
  func.func @transform_3(%arg0: i32, %arg1: i32) -> (i32, i32, i32) {
    %c0_i32 = arith.constant 0 : i32
    %c0_i32_0 = arith.constant 0 : i32
    %c0_i32_1 = arith.constant 0 : i32
    return %arg0, %c0_i32, %c0_i32_0 : i32, i32, i32
  }
}

</mosaic_0001>

<llo_original>
// kernel: dice_loss.1
$region0: #{dice_loss.1}
  #allocation0 [shape = 'u32[]', space=smem, size = 0x4, offset = 0x4, fixed_abs, tag = 'smem constant byte address 0x4 - core index']
  #allocation1 [shape = 'u32[144,128]{1,0:T(1,128)}', space=vmem, size = 0x12000, scoped, tag = 'internal scratch']
  %s0 = inlined_call_operand.vmem [shape: f32[16,128], index: 0, kind: input, shape index: {}]
  %s1 = inlined_call_operand.vmem [shape: f32[16,128], index: 1, kind: input, shape index: {}]
  %s2 = inlined_call_operand.vmem [shape: f32[1,8,128], index: 2, kind: output, shape index: {0}]
  %s3 = inlined_call_operand.vmem [shape: f32[1,8,128], index: 3, kind: output, shape index: {1}]
  %4 = xla_tuple %s2, %s3
  %s5 = sld [smem:[#allocation0]]
  $region30: #{dice_loss.1} parent=0
    _
  %s7 = ssub.s32 1, %s5
  %s8 = scalar_select 0, %s7, %s5
  // Predicated region
  $region2: #{dice_loss.1} parent=0 // pred_check
    _
  $region3: #{dice_loss.1} parent=0 // pred_check_branch
    %10 = sbr.rel (0) target = $region5
  $region4: #{dice_loss.1} parent=0 // pred_region
    %s11 = sadd.s32 0, 0
    %s12 = smul.u32 2, %s11
    %p13 = scmp.lt.s32.totalorder %s12, 1
    %s14 = scalar_select %p13, %s12, 1
    %s15 = smul.addr %s14, 8
    %s16 = scalar_lea.vmem %s0, %s15
    %s17 = sadd.s32 0, 0
    %s18 = smul.u32 2, %s17
  $region5: #{dice_loss.1} parent=0 // pred_fallthru
    _
  // Predicated region
  $region6: #{dice_loss.1} parent=0 // pred_check
    _
  $region7: #{dice_loss.1} parent=0 // pred_check_branch
    %20 = sbr.rel (0) target = $region9
  $region8: #{dice_loss.1} parent=0 // pred_region
    %s21 = sadd.s32 0, 0
    %s22 = smul.u32 2, %s21
    %p23 = scmp.lt.s32.totalorder %s22, 1
    %s24 = scalar_select %p23, %s22, 1
    %s25 = smul.addr %s24, 8
    %s26 = scalar_lea.vmem %s1, %s25
    %s27 = sadd.s32 0, 0
    %s28 = smul.u32 2, %s27
  $region9: #{dice_loss.1} parent=0 // pred_fallthru
    _
  %s29 = sadd.s32 0, 0
  %s30 = smul.u32 2, %s29
  %p31 = scmp.lt.s32.totalorder %s30, 1
  %s32 = scalar_select %p31, %s30, 1
  %s33 = smul.addr %s32, 8
  %s34 = scalar_lea.vmem %s0, %s33
  %s35 = sadd.s32 0, 0
  %s36 = smul.u32 2, %s35
  %p37 = scmp.lt.s32.totalorder %s36, 1
  %s38 = scalar_select %p37, %s36, 1
  %s39 = smul.addr %s38, 8
  %s40 = scalar_lea.vmem %s1, %s39
  %s41 = sadd.s32 0, 0
  %s42 = smul.u32 2, %s41
  %p43 = scmp.lt.s32.totalorder %s42, 1
  %s44 = scalar_select %p43, %s42, 1
  %s45 = smul.addr %s44, 8
  %s46 = scalar_lea.vmem %s0, %s45
  %s47 = sadd.s32 0, 0
  %s48 = smul.u32 2, %s47
  %s49 = sadd.s32 0, 0
  %s50 = smul.u32 2, %s49
  %p51 = scmp.lt.s32.totalorder %s50, 1
  %s52 = scalar_select %p51, %s50, 1
  %s53 = smul.addr %s52, 8
  %s54 = scalar_lea.vmem %s1, %s53
  %s55 = sadd.s32 0, 0
  %s56 = smul.u32 2, %s55
  %p57 = scmp.eq.s32.totalorder 0, 0
  // Predicated region
  $region10: #{dice_loss.1} parent=0 // pred_check
    %p58 = pneg %p57
  $region11: #{dice_loss.1} parent=0 // pred_check_branch
    %60 = sbr.rel (%p58) target = $region13
  $region12: #{dice_loss.1} parent=0 // pred_region
    %61 = vst [vmem:[%s2] sm:$0xff] 0.0
    %62 = vst [vmem:[%s3] sm:$0xff] 0.0
  $region13: #{dice_loss.1} parent=0 // pred_fallthru
    _
  %v63 = vld [vmem:[%s46] sm:$0xff]
  %v64 = vld [vmem:[%s46 + $0x8] sm:$0xff]
  %v65 = vld [vmem:[%s54] sm:$0xff]
  %v66 = vld [vmem:[%s54 + $0x8] sm:$0xff]
  %v67 = vmul.f32 %v63, 0.5
  %v68 = vmul.f32 %v64, 0.5
  %v69 = vtanh.pop %v67
  %v70 = vtanh.pop %v68
  %v71 = vmul.f32 %v69, 0.5
  %v72 = vmul.f32 %v70, 0.5
  %v73 = vadd.f32 %v71, 0.5
  %v74 = vadd.f32 %v72, 0.5
  %v75 = vmul.f32 %v65, %v73
  %v76 = vmul.f32 %v66, %v74
  %v77 = vadd.f32 %v75, %v76
  %v78 = vadd.f32 %v65, %v73
  %v79 = vadd.f32 %v66, %v74
  %v80 = vadd.f32 %v78, %v79
  %v81 = vld [vmem:[%s2] sm:$0xff]
  %v82 = vadd.f32 %v81, %v77
  %83 = vst [vmem:[%s2] sm:$0xff] %v82
  %v84 = vld [vmem:[%s3] sm:$0xff]
  %v85 = vadd.f32 %v84, %v80
  %86 = vst [vmem:[%s3] sm:$0xff] %v85
  // Predicated region
  $region14: #{dice_loss.1} parent=0 // pred_check
    _
  $region15: #{dice_loss.1} parent=0 // pred_check_branch
    %88 = sbr.rel (0) target = $region17
  $region16: #{dice_loss.1} parent=0 // pred_region
    _
  $region17: #{dice_loss.1} parent=0 // pred_fallthru
    _
  // Predicated region
  $region18: #{dice_loss.1} parent=0 // pred_check
    _
  $region19: #{dice_loss.1} parent=0 // pred_check_branch
    %90 = sbr.rel (0) target = $region21
  $region20: #{dice_loss.1} parent=0 // pred_region
    _
  $region21: #{dice_loss.1} parent=0 // pred_fallthru
    _
  // Predicated region
  $region22: #{dice_loss.1} parent=0 // pred_check
    _
  $region23: #{dice_loss.1} parent=0 // pred_check_branch
    %92 = sbr.rel (0) target = $region25
  $region24: #{dice_loss.1} parent=0 // pred_region
    _
  $region25: #{dice_loss.1} parent=0 // pred_fallthru
    _
  // Predicated region
  $region26: #{dice_loss.1} parent=0 // pred_check
    _
  $region27: #{dice_loss.1} parent=0 // pred_check_branch
    %94 = sbr.rel (0) target = $region29
  $region28: #{dice_loss.1} parent=0 // pred_region
    _
  $region29: #{dice_loss.1} parent=0 // pred_fallthru
    _

</llo_original>
